<compile_context>
chip_gen: v6e
topology: v6e:2x2x1
jax: 0.10.0
libtpu: 0.0.40
codegen_flags: <defaults>
</compile_context>

<pallas_src>
import functools

import jax
import jax.numpy as jnp
from jax.experimental import pallas as pl
from jax.experimental.pallas import tpu as pltpu


def _mlp_agent_kernel(x_ref, w1_ref, b1_ref, w2_ref, b2_ref, wq_ref, bq_ref,
                      out_ref):
    """One batch tile of the fused forward pass.

    x_ref : [TB, obs]          w1_ref: [obs, H]     b1_ref: [1, H]   (f32)
    w2_ref: [H, H]             b2_ref: [1, H]       (f32)
    wq_ref: [H, A_pad]         bq_ref: [1, A_pad]   (f32)
    out_ref: [TB, A_pad]       (lane-dense A_pad = multiple of 128)
    Weights may be bf16; matmuls accumulate in f32; bias/ReLU in f32.
    """
    wdt = w1_ref.dtype

    # fc1 + ReLU
    h1 = jnp.dot(x_ref[...].astype(wdt), w1_ref[...],
                 preferred_element_type=jnp.float32)
    h1 = jnp.maximum(h1 + b1_ref[...], 0.0)

    # fc2 + ReLU
    h2 = jnp.dot(h1.astype(wdt), w2_ref[...],
                 preferred_element_type=jnp.float32)
    h2 = jnp.maximum(h2 + b2_ref[...], 0.0)

    # q head (no activation), lane-dense padded output
    q = jnp.dot(h2.astype(wdt), wq_ref[...],
                preferred_element_type=jnp.float32)
    out_ref[...] = (q + bq_ref[...]).astype(out_ref.dtype)


def _round_up(x, m):
    return ((x + m - 1) // m) * m


def _choose_batch_tiling(B, block_b):
    """Balanced batch tiles: fewest, fattest tiles with minimal padding.

    - n_tiles = cdiv(B, block_b): as few grid steps as possible.
    - Multi-tile grids are made even (v7x 2-TC balance; grid=(3,) is 2-vs-1).
    - A single big tile (B >= 512) is split into 2 so v7x's 2nd TC has work.
    - TB is a multiple of 8 (f32 sublane); B_pad = n_tiles * TB >= B adds at
      most 8*n_tiles - 1 dead rows (vs up to TB - 8 with round_up(B, TB)).
    """
    n_tiles = max(1, -(-B // block_b))
    if n_tiles > 1 and n_tiles % 2 == 1:
        n_tiles += 1
    if n_tiles == 1 and B >= 512:
        n_tiles = 2
    TB = _round_up(-(-B // n_tiles), 8)
    B_pad = n_tiles * TB
    return TB, B_pad


@functools.partial(jax.jit,
                   static_argnames=("block_b", "param_dtype", "out_dtype"))
def mlp_agent_forward(x, w1, b1, w2, b2, wq, bq, *, block_b=2048,
                      param_dtype=jnp.bfloat16, out_dtype=jnp.float32):
    """Batched forward pass.  x: [B, obs] -> [B, n_actions] (out_dtype)."""
    assert block_b > 0
    B, obs = x.shape
    H = w1.shape[1]
    A = wq.shape[1]

    # --- lane-dense q head: pad action dim to a multiple of 128 (>= 128). ---
    A_pad = max(128, _round_up(A, 128))
    wq_p = jnp.zeros((H, A_pad), wq.dtype).at[:, :A].set(wq)
    bq_p = jnp.zeros((1, A_pad), bq.dtype).at[:, :A].set(bq)

    # --- MXU-native weight dtype; biases stay f32 (v5e VPU has no bf16). ----
    w1c = w1.astype(param_dtype)
    w2c = w2.astype(param_dtype)
    wqc = wq_p.astype(param_dtype)
    b1c = b1.astype(jnp.float32)
    b2c = b2.astype(jnp.float32)
    bqc = bq_p.astype(jnp.float32)

    # --- balanced batch tiling (few fat tiles, even grid, minimal padding). -
    TB, B_pad = _choose_batch_tiling(B, int(block_b))
    if B_pad != B:
        x = jnp.pad(x, ((0, B_pad - B), (0, 0)))
    grid = (B_pad // TB,)

    const = lambda shape: pl.BlockSpec(shape, lambda i: (0,) * len(shape))

    # --- VMEM footprint estimate; raise the scoped limit only when needed
    #     (v5e default is 16 MiB), capped at v7x's 64 MiB physical VMEM. ------
    wbytes = jnp.dtype(param_dtype).itemsize
    obytes = jnp.dtype(out_dtype).itemsize
    vmem_est = (2 * TB * obs * 4                       # x blocks (dbl-buffered)
                + 2 * TB * A_pad * obytes              # out blocks
                + 2 * (obs * H + H * H + H * A_pad) * wbytes  # weights
                + 2 * (H + H + A_pad) * 4              # biases
                + 2 * TB * H * 4)                      # h1/h2 intermediates
    vmem_limit = None
    if vmem_est > 14 * 1024 * 1024:
        vmem_limit = min(64 * 1024 * 1024, 2 * int(vmem_est))

    out_padded = pl.pallas_call(
        _mlp_agent_kernel,
        out_shape=jax.ShapeDtypeStruct((B_pad, A_pad), out_dtype),
        grid_spec=pltpu.PrefetchScalarGridSpec(
            num_scalar_prefetch=0,
            grid=grid,
            in_specs=[
                pl.BlockSpec((TB, obs), lambda i: (i, 0)),   # streamed per tile
                const((obs, H)), const((1, H)),              # weights resident
                const((H, H)), const((1, H)),
                const((H, A_pad)), const((1, A_pad)),
            ],
            out_specs=pl.BlockSpec((TB, A_pad), lambda i: (i, 0)),
        ),
        compiler_params=pltpu.CompilerParams(
            # Batch axis is independent -> shard across v7x's 2 TensorCores.
            dimension_semantics=("parallel",),
            vmem_limit_bytes=vmem_limit,
        ),
    )(x, w1c, b1c, w2c, b2c, wqc, bqc)

    return out_padded[:B, :A]


def init_linear_params(key, in_features, out_features):
    """PyTorch nn.Linear default init: U(-1/sqrt(in), 1/sqrt(in)).

    Weight returned as [in_features, out_features] (transposed vs PyTorch)."""
    kw, kb = jax.random.split(key)
    bound = 1.0 / jnp.sqrt(jnp.float32(in_features))
    w = jax.random.uniform(kw, (in_features, out_features), jnp.float32,
                           minval=-bound, maxval=bound)
    b = jax.random.uniform(kb, (1, out_features), jnp.float32,
                           minval=-bound, maxval=bound)
    return w, b


def _ref_forward(x, w1, b1, w2, b2, wq, bq, dtype):
    """Pure-JAX reference with the same dtype policy as the kernel."""
    h = jnp.dot(x.astype(dtype), w1.astype(dtype),
                preferred_element_type=jnp.float32) + b1
    h = jnp.maximum(h, 0.0)
    h = jnp.dot(h.astype(dtype), w2.astype(dtype),
                preferred_element_type=jnp.float32) + b2
    h = jnp.maximum(h, 0.0)
    return jnp.dot(h.astype(dtype), wq.astype(dtype),
                   preferred_element_type=jnp.float32) + bq


if __name__ == "__main__":
    # Small shapes consistent with the module's forward.
    batch = 8
    observation_dim = 32
    hidden_dim = 128
    n_actions = 8

    key = jax.random.PRNGKey(0)
    kx, k1, k2, k3, kx2, kx3 = jax.random.split(key, 6)

    x = jax.random.normal(kx, (batch, observation_dim), jnp.float32)
    w1, b1 = init_linear_params(k1, observation_dim, hidden_dim)
    w2, b2 = init_linear_params(k2, hidden_dim, hidden_dim)
    wq, bq = init_linear_params(k3, hidden_dim, n_actions)

    # --- small-batch run (grid=(1,), TB=8) ----------------------------------
    out = mlp_agent_forward(x, w1, b1, w2, b2, wq, bq)
    out = jax.block_until_ready(out)
    assert out.shape == (batch, n_actions)

    # bf16-matched reference (same dtype policy): should agree tightly.
    ref_bf16 = _ref_forward(x, w1, b1, w2, b2, wq, bq, jnp.bfloat16)
    assert jnp.allclose(out, ref_bf16, atol=1e-2, rtol=1e-2), \
        "mismatch vs bf16-matched reference"

    # Full-f32 module semantics: loose tolerance accounts for bf16 weights.
    ref_f32 = jnp.maximum(x @ w1 + b1, 0.0)
    ref_f32 = jnp.maximum(ref_f32 @ w2 + b2, 0.0)
    ref_f32 = ref_f32 @ wq + bq
    assert jnp.allclose(out, ref_f32, atol=5e-2, rtol=5e-2), \
        "mismatch vs f32 module reference"

    # --- awkward batch: balanced tiles, even grid (B=300 -> 4 x 80 = 320) ---
    B2 = 300
    x2 = jax.random.normal(kx2, (B2, observation_dim), jnp.float32)
    out2 = mlp_agent_forward(x2, w1, b1, w2, b2, wq, bq, block_b=128)
    out2 = jax.block_until_ready(out2)
    assert out2.shape == (B2, n_actions)
    ref2 = _ref_forward(x2, w1, b1, w2, b2, wq, bq, jnp.bfloat16)
    assert jnp.allclose(out2, ref2, atol=1e-2, rtol=1e-2), \
        "mismatch vs bf16-matched reference (balanced gridded batch)"

    # --- big batch, default block_b: single tile split in 2 for v7x TCs,
    #     bf16 output path (halves output writeback). ------------------------
    B3 = 600
    x3 = jax.random.normal(kx3, (B3, observation_dim), jnp.float32)
    out3 = mlp_agent_forward(x3, w1, b1, w2, b2, wq, bq,
                             out_dtype=jnp.bfloat16)
    out3 = jax.block_until_ready(out3)
    assert out3.shape == (B3, n_actions) and out3.dtype == jnp.bfloat16
    ref3 = _ref_forward(x3, w1, b1, w2, b2, wq, bq, jnp.bfloat16)
    assert jnp.allclose(out3.astype(jnp.float32), ref3, atol=2e-2, rtol=2e-2), \
        "mismatch vs bf16-matched reference (split batch, bf16 out)"

    print("KERNEL_OK")
</pallas_src>

<mosaic_0001>
module attributes {stable_mosaic.version = 11 : i64} {
  func.func @_mlp_agent_kernel(%arg0: i32, %arg1: memref<8x32xf32, #tpu.memory_space<vmem>>, %arg2: memref<32x128xbf16, #tpu.memory_space<vmem>>, %arg3: memref<1x128xf32, #tpu.memory_space<vmem>>, %arg4: memref<128x128xbf16, #tpu.memory_space<vmem>>, %arg5: memref<1x128xf32, #tpu.memory_space<vmem>>, %arg6: memref<128x128xbf16, #tpu.memory_space<vmem>>, %arg7: memref<1x128xf32, #tpu.memory_space<vmem>>, %arg8: memref<8x128xf32, #tpu.memory_space<vmem>>) attributes {dimension_semantics = [#tpu.dimension_semantics<parallel>], iteration_bounds = array<i64: 1>, scalar_prefetch = 0 : i64, scratch_operands = 0 : i64, tpu.core_type = #tpu.core_type<tc>, window_params = [{transform_indices = @transform_0, window_bounds = array<i64: 8, 32>}, {pipeline_mode = #tpu.pipeline_mode<synchronous>, transform_indices = @transform_1, window_bounds = array<i64: 32, 128>}, {pipeline_mode = #tpu.pipeline_mode<synchronous>, transform_indices = @transform_2, window_bounds = array<i64: 1, 128>}, {pipeline_mode = #tpu.pipeline_mode<synchronous>, transform_indices = @transform_3, window_bounds = array<i64: 128, 128>}, {pipeline_mode = #tpu.pipeline_mode<synchronous>, transform_indices = @transform_4, window_bounds = array<i64: 1, 128>}, {pipeline_mode = #tpu.pipeline_mode<synchronous>, transform_indices = @transform_5, window_bounds = array<i64: 128, 128>}, {pipeline_mode = #tpu.pipeline_mode<synchronous>, transform_indices = @transform_6, window_bounds = array<i64: 1, 128>}, {transform_indices = @transform_7, window_bounds = array<i64: 8, 128>}]} {
    %c0 = arith.constant 0 : index
    %c0_0 = arith.constant 0 : index
    %0 = vector.load %arg1[%c0, %c0_0] : memref<8x32xf32, #tpu.memory_space<vmem>>, vector<8x32xf32>
    %1 = arith.truncf %0 : vector<8x32xf32> to vector<8x32xbf16>
    %c0_1 = arith.constant 0 : index
    %c0_2 = arith.constant 0 : index
    %2 = vector.load %arg2[%c0_1, %c0_2] : memref<32x128xbf16, #tpu.memory_space<vmem>>, vector<32x128xbf16>
    %cst = arith.constant dense<0.000000e+00> : vector<8x128xf32>
    %3 = tpu.matmul %1, %2, %cst {dimension_numbers = #tpu.dot_dimension_numbers<[1], [0], [0], [1], [0, 0, 1, 1], [], []>} : vector<8x32xbf16>, vector<32x128xbf16>, vector<8x128xf32> -> vector<8x128xf32>
    %c0_3 = arith.constant 0 : index
    %c0_4 = arith.constant 0 : index
    %4 = vector.load %arg3[%c0_3, %c0_4] : memref<1x128xf32, #tpu.memory_space<vmem>>, vector<1x128xf32>
    %5 = vector.broadcast %4 : vector<1x128xf32> to vector<8x128xf32>
    %6 = arith.addf %3, %5 : vector<8x128xf32>
    %cst_5 = arith.constant 0.000000e+00 : f32
    %7 = vector.broadcast %cst_5 : f32 to vector<8x128xf32>
    %8 = arith.maximumf %6, %7 : vector<8x128xf32>
    %9 = arith.truncf %8 : vector<8x128xf32> to vector<8x128xbf16>
    %c0_6 = arith.constant 0 : index
    %c0_7 = arith.constant 0 : index
    %10 = vector.load %arg4[%c0_6, %c0_7] : memref<128x128xbf16, #tpu.memory_space<vmem>>, vector<128x128xbf16>
    %cst_8 = arith.constant dense<0.000000e+00> : vector<8x128xf32>
    %11 = tpu.matmul %9, %10, %cst_8 {dimension_numbers = #tpu.dot_dimension_numbers<[1], [0], [0], [1], [0, 0, 1, 1], [], []>} : vector<8x128xbf16>, vector<128x128xbf16>, vector<8x128xf32> -> vector<8x128xf32>
    %c0_9 = arith.constant 0 : index
    %c0_10 = arith.constant 0 : index
    %12 = vector.load %arg5[%c0_9, %c0_10] : memref<1x128xf32, #tpu.memory_space<vmem>>, vector<1x128xf32>
    %13 = vector.broadcast %12 : vector<1x128xf32> to vector<8x128xf32>
    %14 = arith.addf %11, %13 : vector<8x128xf32>
    %cst_11 = arith.constant 0.000000e+00 : f32
    %15 = vector.broadcast %cst_11 : f32 to vector<8x128xf32>
    %16 = arith.maximumf %14, %15 : vector<8x128xf32>
    %17 = arith.truncf %16 : vector<8x128xf32> to vector<8x128xbf16>
    %c0_12 = arith.constant 0 : index
    %c0_13 = arith.constant 0 : index
    %18 = vector.load %arg6[%c0_12, %c0_13] : memref<128x128xbf16, #tpu.memory_space<vmem>>, vector<128x128xbf16>
    %cst_14 = arith.constant dense<0.000000e+00> : vector<8x128xf32>
    %19 = tpu.matmul %17, %18, %cst_14 {dimension_numbers = #tpu.dot_dimension_numbers<[1], [0], [0], [1], [0, 0, 1, 1], [], []>} : vector<8x128xbf16>, vector<128x128xbf16>, vector<8x128xf32> -> vector<8x128xf32>
    %c0_15 = arith.constant 0 : index
    %c0_16 = arith.constant 0 : index
    %20 = vector.load %arg7[%c0_15, %c0_16] : memref<1x128xf32, #tpu.memory_space<vmem>>, vector<1x128xf32>
    %21 = vector.broadcast %20 : vector<1x128xf32> to vector<8x128xf32>
    %22 = arith.addf %19, %21 : vector<8x128xf32>
    %c0_17 = arith.constant 0 : index
    %c0_18 = arith.constant 0 : index
    %23 = vector.load %arg8[%c0_17, %c0_18] : memref<8x128xf32, #tpu.memory_space<vmem>>, vector<8x128xf32>
    tpu.vector_store %arg8[%c0_17, %c0_18], %22 {strides = array<i32>} : memref<8x128xf32, #tpu.memory_space<vmem>>, vector<8x128xf32>,
    return
  }
  func.func @transform_0(%arg0: i32) -> (i32, i32) {
    %c0_i32 = arith.constant 0 : i32
    %c0_i32_0 = arith.constant 0 : i32
    return %arg0, %c0_i32 : i32, i32
  }
  func.func @transform_1(%arg0: i32) -> (i32, i32) {
    %c0_i32 = arith.constant 0 : i32
    %c0_i32_0 = arith.constant 0 : i32
    %c0_i32_1 = arith.constant 0 : i32
    return %c0_i32, %c0_i32_0 : i32, i32
  }
  func.func @transform_2(%arg0: i32) -> (i32, i32) {
    %c0_i32 = arith.constant 0 : i32
    %c0_i32_0 = arith.constant 0 : i32
    %c0_i32_1 = arith.constant 0 : i32
    return %c0_i32, %c0_i32_0 : i32, i32
  }
  func.func @transform_3(%arg0: i32) -> (i32, i32) {
    %c0_i32 = arith.constant 0 : i32
    %c0_i32_0 = arith.constant 0 : i32
    %c0_i32_1 = arith.constant 0 : i32
    return %c0_i32, %c0_i32_0 : i32, i32
  }
  func.func @transform_4(%arg0: i32) -> (i32, i32) {
    %c0_i32 = arith.constant 0 : i32
    %c0_i32_0 = arith.constant 0 : i32
    %c0_i32_1 = arith.constant 0 : i32
    return %c0_i32, %c0_i32_0 : i32, i32
  }
  func.func @transform_5(%arg0: i32) -> (i32, i32) {
    %c0_i32 = arith.constant 0 : i32
    %c0_i32_0 = arith.constant 0 : i32
    %c0_i32_1 = arith.constant 0 : i32
    return %c0_i32, %c0_i32_0 : i32, i32
  }
  func.func @transform_6(%arg0: i32) -> (i32, i32) {
    %c0_i32 = arith.constant 0 : i32
    %c0_i32_0 = arith.constant 0 : i32
    %c0_i32_1 = arith.constant 0 : i32
    return %c0_i32, %c0_i32_0 : i32, i32
  }
  func.func @transform_7(%arg0: i32) -> (i32, i32) {
    %c0_i32 = arith.constant 0 : i32
    %c0_i32_0 = arith.constant 0 : i32
    return %arg0, %c0_i32 : i32, i32
  }
}

</mosaic_0001>

<llo_original>
// kernel: mlp_agent_forward.1
$region0: #{mlp_agent_forward.1}
  #allocation0 [shape = 'u32[]', space=smem, size = 0x4, offset = 0x4, fixed_abs, tag = 'smem constant byte address 0x4 - core index']
  #allocation1 [shape = 'u32[144,128]{1,0:T(1,128)}', space=vmem, size = 0x12000, scoped, tag = 'internal scratch']
  %s0 = inlined_call_operand.vmem [shape: f32[8,32], index: 0, kind: input, shape index: {}]
  %s1 = inlined_call_operand.vmem [shape: bf16[32,128], index: 1, kind: input, shape index: {}]
  %s2 = inlined_call_operand.vmem [shape: f32[1,128], index: 2, kind: input, shape index: {}]
  %s3 = inlined_call_operand.vmem [shape: bf16[128,128], index: 3, kind: input, shape index: {}]
  %s4 = inlined_call_operand.vmem [shape: f32[1,128], index: 4, kind: input, shape index: {}]
  %s5 = inlined_call_operand.vmem [shape: bf16[128,128], index: 5, kind: input, shape index: {}]
  %s6 = inlined_call_operand.vmem [shape: f32[1,128], index: 6, kind: input, shape index: {}]
  %s7 = inlined_call_operand.hbm [shape: f32[8,128], index: 7, kind: output, shape index: {}]
  %s8 = sld [smem:[#allocation0]]
  $region38: #{mlp_agent_forward.1} parent=0
    _
  %s10 = ssub.s32 1, %s8
  %s11 = scalar_select 0, %s10, %s8
  $region1: #{mlp_agent_forward.1} parent=0
    #allocation2 [shape = 'u8[4096]{0}', space=vmem, size = 0x1000, scoped, tag = 'output window, operand 0, single buffered']
    #allocation3 [shape = 's32[1]{0}', space=sflag, size = 0x4, scoped, tag = 'scoped memory for mlp_agent_forward.1']
    %12 = vsyncpa [#allocation3], 0
    // Predicated region
    $region2: #{mlp_agent_forward.1} parent=1 // pred_check
      _
    $region3: #{mlp_agent_forward.1} parent=1 // pred_check_branch
      %14 = sbr.rel (0) target = $region5
    $region4: #{mlp_agent_forward.1} parent=1 // pred_region
      _
    $region5: #{mlp_agent_forward.1} parent=1 // pred_fallthru
      _
    // Predicated region
    $region6: #{mlp_agent_forward.1} parent=1 // pred_check
      _
    $region7: #{mlp_agent_forward.1} parent=1 // pred_check_branch
      %16 = sbr.rel (0) target = $region9
    $region8: #{mlp_agent_forward.1} parent=1 // pred_region
      _
    $region9: #{mlp_agent_forward.1} parent=1 // pred_fallthru
      _
    // Predicated region
    $region10: #{mlp_agent_forward.1} parent=1 // pred_check
      _
    $region11: #{mlp_agent_forward.1} parent=1 // pred_check_branch
      %18 = sbr.rel (0) target = $region13
    $region12: #{mlp_agent_forward.1} parent=1 // pred_region
      _
    $region13: #{mlp_agent_forward.1} parent=1 // pred_fallthru
      _
    // Predicated region
    $region14: #{mlp_agent_forward.1} parent=1 // pred_check
      _
    $region15: #{mlp_agent_forward.1} parent=1 // pred_check_branch
      %20 = sbr.rel (0) target = $region17
    $region16: #{mlp_agent_forward.1} parent=1 // pred_region
      _
    $region17: #{mlp_agent_forward.1} parent=1 // pred_fallthru
      _
    // Predicated region
    $region18: #{mlp_agent_forward.1} parent=1 // pred_check
      _
    $region19: #{mlp_agent_forward.1} parent=1 // pred_check_branch
      %22 = sbr.rel (0) target = $region21
    $region20: #{mlp_agent_forward.1} parent=1 // pred_region
      _
    $region21: #{mlp_agent_forward.1} parent=1 // pred_fallthru
      _
    // Predicated region
    $region22: #{mlp_agent_forward.1} parent=1 // pred_check
      _
    $region23: #{mlp_agent_forward.1} parent=1 // pred_check_branch
      %24 = sbr.rel (0) target = $region25
    $region24: #{mlp_agent_forward.1} parent=1 // pred_region
      _
    $region25: #{mlp_agent_forward.1} parent=1 // pred_fallthru
      _
    // Predicated region
    $region26: #{mlp_agent_forward.1} parent=1 // pred_check
      _
    $region27: #{mlp_agent_forward.1} parent=1 // pred_check_branch
      %26 = sbr.rel (0) target = $region29
    $region28: #{mlp_agent_forward.1} parent=1 // pred_region
      _
    $region29: #{mlp_agent_forward.1} parent=1 // pred_fallthru
      _
    %v28 = vld [vmem:[%s0] sm:$0xff]
    %v29 = vpack.c.bf16 %v28, %v28
    %v30 = vld [vmem:[%s1] sm:$0xf]
    %v31 = vld [vmem:[%s1 + $0x4] sm:$0xf]
    %v32 = vld [vmem:[%s1 + $0x8] sm:$0xf]
    %v33 = vld [vmem:[%s1 + $0xc] sm:$0xf]
    %v34 = vld [vmem:[%s2] sm:$0x1]
    %v36 = vlaneseq
    %v37 = vshrl.u32 %v36, 7
    %v38 = vsub.s32 0, %v37
    %v39 = vrot.slane %v34, %v38
    %v45 = vunpack.c.l.b16 %v30
    %v46 = vunpack.c.l.b16 %v31
    %v47 = vunpack.c.l.b16 %v32
    %v48 = vunpack.c.l.b16 %v33
    %v49 = vpack.c.b16 %v46, %v45
    %v50 = vpack.c.b16 %v48, %v47
    %vm53 = vcmask 261120
    %v55 = vsel %vm53, %v29, 0
    %57 = vmatprep.subr.bf16.mxu0 0
    %58 = vmatpush1.bf16.msra.mxu0 0
    %59 = vmatprep.subr.bf16.mxu0 0
    %60 = vmatpush1.bf16.msra.mxu0 0
    %61 = vmatprep.subr.bf16.mxu0 0
    %62 = vmatpush1.bf16.msra.mxu0 0
    %63 = vmatprep.subr.bf16.mxu0 0
    %64 = vmatpush1.bf16.msra.mxu0 0
    %65 = vmatprep.subr.bf16.mxu0 0
    %66 = vmatpush1.bf16.msra.mxu0 0
    %67 = vmatprep.subr.bf16.mxu0 0
    %68 = vmatpush1.bf16.msra.mxu0 0
    %69 = vmatprep.subr.bf16.mxu0 0
    %70 = vmatpush1.bf16.msra.mxu0 %v50
    %71 = vmatprep.subr.bf16.mxu0 0
    %72 = vmatpush1.bf16.msra.mxu0 %v49
    %73 = vmatprep.subr.bf16.mxu0 0
    %74 = vmatpush2.bf16.msra.mxu0 0
    %75 = vmatprep.subr.bf16.mxu0 0
    %76 = vmatpush2.bf16.msra.mxu0 0
    %77 = vmatprep.subr.bf16.mxu0 0
    %78 = vmatpush2.bf16.msra.mxu0 0
    %79 = vmatprep.subr.bf16.mxu0 0
    %80 = vmatpush2.bf16.msra.mxu0 0
    %81 = vmatprep.subr.bf16.mxu0 0
    %82 = vmatpush2.bf16.msra.mxu0 0
    %83 = vmatprep.subr.bf16.mxu0 0
    %84 = vmatpush2.bf16.msra.mxu0 0
    %85 = vmatprep.subr.bf16.mxu0 0
    %86 = vmatpush2.bf16.msra.mxu0 0
    %87 = vmatprep.subr.bf16.mxu0 0
    %88 = vmatpush2.bf16.msra.mxu0 0
    %89 = vmatprep.mubr.bf16.mxu0 0
    %90 = vmatmul.mubr.bf16.gmra.mxu0 %v55
    %v91 = vpop.f32.mrf.mxu0
    %v92 = vadd.f32 %v39, %v91
    %v93 = vpop.f32.mrf.mxu0
    %v94 = vpop.f32.mrf.mxu0
    %v95 = vpop.f32.mrf.mxu0
    %96 = vdwg.mxu0
    %v97 = vmax.f32 %v92, 0.0
    %v98 = vpack.c.bf16 %v97, %v97
    %v99 = vld [vmem:[%s3] sm:$0xf]
    %v100 = vld [vmem:[%s3 + $0x4] sm:$0xf]
    %v101 = vld [vmem:[%s3 + $0x8] sm:$0xf]
    %v102 = vld [vmem:[%s3 + $0xc] sm:$0xf]
    %v103 = vld [vmem:[%s3 + $0x10] sm:$0xf]
    %v104 = vld [vmem:[%s3 + $0x14] sm:$0xf]
    %v105 = vld [vmem:[%s3 + $0x18] sm:$0xf]
    %v106 = vld [vmem:[%s3 + $0x1c] sm:$0xf]
    %v107 = vld [vmem:[%s3 + $0x20] sm:$0xf]
    %v108 = vld [vmem:[%s3 + $0x24] sm:$0xf]
    %v109 = vld [vmem:[%s3 + $0x28] sm:$0xf]
    %v110 = vld [vmem:[%s3 + $0x2c] sm:$0xf]
    %v111 = vld [vmem:[%s3 + $0x30] sm:$0xf]
    %v112 = vld [vmem:[%s3 + $0x34] sm:$0xf]
    %v113 = vld [vmem:[%s3 + $0x38] sm:$0xf]
    %v114 = vld [vmem:[%s3 + $0x3c] sm:$0xf]
    %v115 = vld [vmem:[%s4] sm:$0x1]
    %v117 = vlaneseq
    %v118 = vshrl.u32 %v117, 7
    %v119 = vsub.s32 0, %v118
    %v120 = vrot.slane %v115, %v119
    %v138 = vunpack.c.l.b16 %v99
    %v139 = vunpack.c.l.b16 %v100
    %v140 = vunpack.c.l.b16 %v101
    %v141 = vunpack.c.l.b16 %v102
    %v142 = vunpack.c.l.b16 %v103
    %v143 = vunpack.c.l.b16 %v104
    %v144 = vunpack.c.l.b16 %v105
    %v145 = vunpack.c.l.b16 %v106
    %v146 = vunpack.c.l.b16 %v107
    %v147 = vunpack.c.l.b16 %v108
    %v148 = vunpack.c.l.b16 %v109
    %v149 = vunpack.c.l.b16 %v110
    %v150 = vunpack.c.l.b16 %v111
    %v151 = vunpack.c.l.b16 %v112
    %v152 = vunpack.c.l.b16 %v113
    %v153 = vunpack.c.l.b16 %v114
    %v154 = vpack.c.b16 %v139, %v138
    %v155 = vpack.c.b16 %v141, %v140
    %v156 = vpack.c.b16 %v143, %v142
    %v157 = vpack.c.b16 %v145, %v144
    %v158 = vpack.c.b16 %v147, %v146
    %v159 = vpack.c.b16 %v149, %v148
    %v160 = vpack.c.b16 %v151, %v150
    %v161 = vpack.c.b16 %v153, %v152
    %170 = vmatprep.subr.bf16.mxu0 0
    %171 = vmatpush1.bf16.msra.mxu0 %v161
    %172 = vmatprep.subr.bf16.mxu0 0
    %173 = vmatpush1.bf16.msra.mxu0 %v160
    %174 = vmatprep.subr.bf16.mxu0 0
    %175 = vmatpush1.bf16.msra.mxu0 %v159
    %176 = vmatprep.subr.bf16.mxu0 0
    %177 = vmatpush1.bf16.msra.mxu0 %v158
    %178 = vmatprep.subr.bf16.mxu0 0
    %179 = vmatpush1.bf16.msra.mxu0 %v157
    %180 = vmatprep.subr.bf16.mxu0 0
    %181 = vmatpush1.bf16.msra.mxu0 %v156
    %182 = vmatprep.subr.bf16.mxu0 0
    %183 = vmatpush1.bf16.msra.mxu0 %v155
    %184 = vmatprep.subr.bf16.mxu0 0
    %185 = vmatpush1.bf16.msra.mxu0 %v154
    %186 = vmatprep.subr.bf16.mxu0 0
    %187 = vmatpush2.bf16.msra.mxu0 0
    %188 = vmatprep.subr.bf16.mxu0 0
    %189 = vmatpush2.bf16.msra.mxu0 0
    %190 = vmatprep.subr.bf16.mxu0 0
    %191 = vmatpush2.bf16.msra.mxu0 0
    %192 = vmatprep.subr.bf16.mxu0 0
    %193 = vmatpush2.bf16.msra.mxu0 0
    %194 = vmatprep.subr.bf16.mxu0 0
    %195 = vmatpush2.bf16.msra.mxu0 0
    %196 = vmatprep.subr.bf16.mxu0 0
    %197 = vmatpush2.bf16.msra.mxu0 0
    %198 = vmatprep.subr.bf16.mxu0 0
    %199 = vmatpush2.bf16.msra.mxu0 0
    %200 = vmatprep.subr.bf16.mxu0 0
    %201 = vmatpush2.bf16.msra.mxu0 0
    %202 = vmatprep.mubr.bf16.mxu0 0
    %203 = vmatmul.mubr.bf16.gmra.mxu0 %v98
    %v204 = vpop.f32.mrf.mxu0
    %v205 = vadd.f32 %v120, %v204
    %v206 = vpop.f32.mrf.mxu0
    %v207 = vpop.f32.mrf.mxu0
    %v208 = vpop.f32.mrf.mxu0
    %209 = vdwg.mxu0
    %v210 = vmax.f32 %v205, 0.0
    %v211 = vpack.c.bf16 %v210, %v210
    %v212 = vld [vmem:[%s5] sm:$0xf]
    %v213 = vld [vmem:[%s5 + $0x4] sm:$0xf]
    %v214 = vld [vmem:[%s5 + $0x8] sm:$0xf]
    %v215 = vld [vmem:[%s5 + $0xc] sm:$0xf]
    %v216 = vld [vmem:[%s5 + $0x10] sm:$0xf]
    %v217 = vld [vmem:[%s5 + $0x14] sm:$0xf]
    %v218 = vld [vmem:[%s5 + $0x18] sm:$0xf]
    %v219 = vld [vmem:[%s5 + $0x1c] sm:$0xf]
    %v220 = vld [vmem:[%s5 + $0x20] sm:$0xf]
    %v221 = vld [vmem:[%s5 + $0x24] sm:$0xf]
    %v222 = vld [vmem:[%s5 + $0x28] sm:$0xf]
    %v223 = vld [vmem:[%s5 + $0x2c] sm:$0xf]
    %v224 = vld [vmem:[%s5 + $0x30] sm:$0xf]
    %v225 = vld [vmem:[%s5 + $0x34] sm:$0xf]
    %v226 = vld [vmem:[%s5 + $0x38] sm:$0xf]
    %v227 = vld [vmem:[%s5 + $0x3c] sm:$0xf]
    %v228 = vld [vmem:[%s6] sm:$0x1]
    %v230 = vlaneseq
    %v231 = vshrl.u32 %v230, 7
    %v232 = vsub.s32 0, %v231
    %v233 = vrot.slane %v228, %v232
    %v251 = vunpack.c.l.b16 %v212
    %v252 = vunpack.c.l.b16 %v213
    %v253 = vunpack.c.l.b16 %v214
    %v254 = vunpack.c.l.b16 %v215
    %v255 = vunpack.c.l.b16 %v216
    %v256 = vunpack.c.l.b16 %v217
    %v257 = vunpack.c.l.b16 %v218
    %v258 = vunpack.c.l.b16 %v219
    %v259 = vunpack.c.l.b16 %v220
    %v260 = vunpack.c.l.b16 %v221
    %v261 = vunpack.c.l.b16 %v222
    %v262 = vunpack.c.l.b16 %v223
    %v263 = vunpack.c.l.b16 %v224
    %v264 = vunpack.c.l.b16 %v225
    %v265 = vunpack.c.l.b16 %v226
    %v266 = vunpack.c.l.b16 %v227
    %v267 = vpack.c.b16 %v252, %v251
    %v268 = vpack.c.b16 %v254, %v253
    %v269 = vpack.c.b16 %v256, %v255
    %v270 = vpack.c.b16 %v258, %v257
    %v271 = vpack.c.b16 %v260, %v259
    %v272 = vpack.c.b16 %v262, %v261
    %v273 = vpack.c.b16 %v264, %v263
    %v274 = vpack.c.b16 %v266, %v265
    %283 = vmatprep.subr.bf16.mxu0 0
    %284 = vmatpush1.bf16.msra.mxu0 %v274
    %285 = vmatprep.subr.bf16.mxu0 0
    %286 = vmatpush1.bf16.msra.mxu0 %v273
    %287 = vmatprep.subr.bf16.mxu0 0
    %288 = vmatpush1.bf16.msra.mxu0 %v272
    %289 = vmatprep.subr.bf16.mxu0 0
    %290 = vmatpush1.bf16.msra.mxu0 %v271
    %291 = vmatprep.subr.bf16.mxu0 0
    %292 = vmatpush1.bf16.msra.mxu0 %v270
    %293 = vmatprep.subr.bf16.mxu0 0
    %294 = vmatpush1.bf16.msra.mxu0 %v269
    %295 = vmatprep.subr.bf16.mxu0 0
    %296 = vmatpush1.bf16.msra.mxu0 %v268
    %297 = vmatprep.subr.bf16.mxu0 0
    %298 = vmatpush1.bf16.msra.mxu0 %v267
    %299 = vmatprep.subr.bf16.mxu0 0
    %300 = vmatpush2.bf16.msra.mxu0 0
    %301 = vmatprep.subr.bf16.mxu0 0
    %302 = vmatpush2.bf16.msra.mxu0 0
    %303 = vmatprep.subr.bf16.mxu0 0
    %304 = vmatpush2.bf16.msra.mxu0 0
    %305 = vmatprep.subr.bf16.mxu0 0
    %306 = vmatpush2.bf16.msra.mxu0 0
    %307 = vmatprep.subr.bf16.mxu0 0
    %308 = vmatpush2.bf16.msra.mxu0 0
    %309 = vmatprep.subr.bf16.mxu0 0
    %310 = vmatpush2.bf16.msra.mxu0 0
    %311 = vmatprep.subr.bf16.mxu0 0
    %312 = vmatpush2.bf16.msra.mxu0 0
    %313 = vmatprep.subr.bf16.mxu0 0
    %314 = vmatpush2.bf16.msra.mxu0 0
    %315 = vmatprep.mubr.bf16.mxu0 0
    %316 = vmatmul.mubr.bf16.gmra.mxu0 %v211
    %v317 = vpop.f32.mrf.mxu0
    %v318 = vadd.f32 %v233, %v317
    %v319 = vpop.f32.mrf.mxu0
    %v320 = vpop.f32.mrf.mxu0
    %v321 = vpop.f32.mrf.mxu0
    %322 = vdwg.mxu0
    %323 = vst [vmem:[#allocation2] sm:$0xff] %v318
    // Predicated region
    $region30: #{mlp_agent_forward.1} parent=1 // pred_check
      _
    $region31: #{mlp_agent_forward.1} parent=1 // pred_check_branch
      %325 = sbr.rel (0) target = $region33
    $region32: #{mlp_agent_forward.1} parent=1 // pred_region
      %s327 = ssub.s32 128, 128
      %328 = vsyncadd [#allocation3], %s327
      %s330 = sshll.u32 [#allocation2], 4
      %s331 = int_to_ptr.vmem [resolvable:$true] %s330
      %333 = dma.vmem_to_hbm [thread:$0]  %s331, 128, %s7, [#allocation3]
    $region33: #{mlp_agent_forward.1} parent=1 // pred_fallthru
      _
    // Predicated region
    $region34: #{mlp_agent_forward.1} parent=1 // pred_check
      _
    $region35: #{mlp_agent_forward.1} parent=1 // pred_check_branch
      %335 = sbr.rel (0) target = $region37
    $region36: #{mlp_agent_forward.1} parent=1 // pred_region
      %336 = dma.done [#allocation3], 128
    $region37: #{mlp_agent_forward.1} parent=1 // pred_fallthru
      _
    %337 = vsyncpa [#allocation3], 1

</llo_original>
